<compile_context>
chip_gen: v5e
topology: v5e:2x2
jax: 0.10.0
libtpu: 0.0.40
codegen_flags: <defaults>
</compile_context>

<pallas_src>
import functools

import jax
import jax.numpy as jnp
from jax.experimental import pallas as pl
from jax.experimental.pallas import tpu as pltpu

LANES = 128
NCORES = 2            # leading "parallel" grid axis (2 TCs on v7x)
MAX_TILE_ROWS = 1024  # (1024, 128) f32 block = 512 KiB per stream


def _round_up(x, m):
    return (x + m - 1) // m * m


def _bce_blur_kernel(pred_ref, true_ref, out_ref, acc_ref, *, alpha):
    i = pl.program_id(1)

    @pl.when(i == 0)
    def _():
        acc_ref[...] = jnp.zeros_like(acc_ref)

    x = pred_ref[...].astype(jnp.float32)
    t = true_ref[...].astype(jnp.float32)

    # Single exp(-|x|) shared between the stable BCE and the sigmoid.
    e = jnp.exp(-jnp.abs(x))
    bce = jnp.maximum(x, 0.0) - x * t + jnp.log1p(e)
    r = 1.0 / (1.0 + e)
    p = jnp.where(x >= 0.0, r, e * r)          # == sigmoid(x)
    dx = p - t
    alpha_factor = 1.0 - jnp.exp((dx - 1.0) / (alpha + 0.0001))

    acc_ref[...] += bce * alpha_factor         # pure VPU adds in steady state

    @pl.when(i == pl.num_programs(1) - 1)
    def _():
        # One sublane (XLU) reduce per core; lane/core sum done in wrapper.
        out_ref[0] = jnp.sum(acc_ref[...], axis=0, keepdims=True)


def bce_blur_with_logits_loss(pred, true, alpha=0.05):
    assert pred.shape == true.shape
    n = pred.size
    itemsize = jnp.dtype(pred.dtype).itemsize
    sub = max(8, 32 // itemsize)               # sublane multiple for dtype

    rows = pl.cdiv(n, LANES)
    tile_rows = min(MAX_TILE_ROWS, _round_up(pl.cdiv(rows, NCORES), sub))
    padded_rows = _round_up(rows, NCORES * tile_rows)
    tiles_per_core = padded_rows // (NCORES * tile_rows)
    n_pad = padded_rows * LANES

    pred_f = pred.reshape(-1)
    true_f = true.reshape(-1)
    pad = n_pad - n
    if pad:
        # Padded logits = -1e4, targets = 0 -> loss exactly 0, no mask needed.
        pred_f = jnp.pad(pred_f, (0, pad), constant_values=-1e4)
        true_f = jnp.pad(true_f, (0, pad), constant_values=0)

    pred2 = pred_f.reshape(padded_rows, LANES)
    true2 = true_f.reshape(padded_rows, LANES)

    in_spec = pl.BlockSpec(
        (tile_rows, LANES), lambda c, i: (c * tiles_per_core + i, 0))

    partials = pl.pallas_call(
        functools.partial(_bce_blur_kernel, alpha=alpha),
        out_shape=jax.ShapeDtypeStruct((NCORES, 1, LANES), jnp.float32),
        grid_spec=pltpu.PrefetchScalarGridSpec(
            num_scalar_prefetch=0,
            grid=(NCORES, tiles_per_core),
            in_specs=[in_spec, in_spec],
            out_specs=pl.BlockSpec((1, 1, LANES), lambda c, i: (c, 0, 0)),
            scratch_shapes=[pltpu.VMEM((tile_rows, LANES), jnp.float32)],
        ),
        compiler_params=pltpu.CompilerParams(
            dimension_semantics=("parallel", "arbitrary"),
        ),
        cost_estimate=pl.CostEstimate(
            flops=15 * n_pad,
            transcendentals=3 * n_pad,
            bytes_accessed=2 * n_pad * itemsize + NCORES * LANES * 4,
        ),
    )(pred2, true2)

    return (jnp.sum(partials) / jnp.float32(n)).astype(jnp.float32)


def _reference(pred, true, alpha=0.05):
    x = pred.astype(jnp.float32)
    t = true.astype(jnp.float32)
    loss = jnp.maximum(x, 0.0) - x * t + jnp.log1p(jnp.exp(-jnp.abs(x)))
    p = jax.nn.sigmoid(x)
    dx = p - t
    loss = loss * (1.0 - jnp.exp((dx - 1.0) / (alpha + 0.0001)))
    return jnp.mean(loss)


if __name__ == "__main__":
    key = jax.random.PRNGKey(0)
    k1, k2 = jax.random.split(key)
    # NCHW-shaped logits / targets, as the PyTorch module would receive.
    pred = jax.random.normal(k1, (2, 4, 16, 16), dtype=jnp.float32)
    true = (jax.random.uniform(k2, (2, 4, 16, 16)) > 0.5).astype(jnp.float32)

    out = bce_blur_with_logits_loss(pred, true, alpha=0.05)
    out = jax.block_until_ready(out)

    ref = _reference(pred, true, alpha=0.05)
    assert jnp.allclose(out, ref, rtol=1e-5, atol=1e-5), (out, ref)
    print("KERNEL_OK")
</pallas_src>

<mosaic_0001>
module attributes {stable_mosaic.version = 11 : i64} {
  func.func @_bce_blur_kernel(%arg0: i32, %arg1: i32, %arg2: memref<8x128xf32, #tpu.memory_space<vmem>>, %arg3: memref<8x128xf32, #tpu.memory_space<vmem>>, %arg4: memref<1x1x128xf32, #tpu.memory_space<vmem>>, %arg5: memref<8x128xf32, #tpu.memory_space<vmem>>) attributes {dimension_semantics = [#tpu.dimension_semantics<parallel>, #tpu.dimension_semantics<arbitrary>], iteration_bounds = array<i64: 2, 1>, scalar_prefetch = 0 : i64, scratch_operands = 1 : i64, tpu.core_type = #tpu.core_type<tc>, window_params = [{transform_indices = @transform_0, window_bounds = array<i64: 8, 128>}, {transform_indices = @transform_1, window_bounds = array<i64: 8, 128>}, {transform_indices = @transform_2, window_bounds = array<i64: 1, 1, 128>}]} {
    %c0_i32 = arith.constant 0 : i32
    %0 = arith.cmpi eq, %arg1, %c0_i32 : i32
    %1 = arith.extui %0 : i1 to i32
    %c0_i32_0 = arith.constant 0 : i32
    %2 = arith.cmpi ne, %1, %c0_i32_0 : i32
    scf.if %2 {
      %cst_17 = arith.constant 0.000000e+00 : f32
      %38 = vector.broadcast %cst_17 : f32 to vector<8x128xf32>
      %c0_18 = arith.constant 0 : index
      %c0_19 = arith.constant 0 : index
      %39 = vector.load %arg5[%c0_18, %c0_19] : memref<8x128xf32, #tpu.memory_space<vmem>>, vector<8x128xf32>
      tpu.vector_store %arg5[%c0_18, %c0_19], %38 {strides = array<i32>} : memref<8x128xf32, #tpu.memory_space<vmem>>, vector<8x128xf32>,
    } else {
    }
    %c0 = arith.constant 0 : index
    %c0_1 = arith.constant 0 : index
    %3 = vector.load %arg2[%c0, %c0_1] : memref<8x128xf32, #tpu.memory_space<vmem>>, vector<8x128xf32>
    %c0_2 = arith.constant 0 : index
    %c0_3 = arith.constant 0 : index
    %4 = vector.load %arg3[%c0_2, %c0_3] : memref<8x128xf32, #tpu.memory_space<vmem>>, vector<8x128xf32>
    %5 = math.absf %3 : vector<8x128xf32>
    %cst = arith.constant 0.000000e+00 : f32
    %6 = vector.broadcast %cst : f32 to vector<8x128xf32>
    %7 = arith.subf %6, %5 : vector<8x128xf32>
    %8 = math.exp %7 : vector<8x128xf32>
    %cst_4 = arith.constant 0.000000e+00 : f32
    %9 = vector.broadcast %cst_4 : f32 to vector<8x128xf32>
    %10 = arith.maximumf %3, %9 : vector<8x128xf32>
    %11 = arith.mulf %3, %4 : vector<8x128xf32>
    %12 = arith.subf %10, %11 : vector<8x128xf32>
    %13 = math.log1p %8 : vector<8x128xf32>
    %14 = arith.addf %12, %13 : vector<8x128xf32>
    %cst_5 = arith.constant 1.000000e+00 : f32
    %15 = vector.broadcast %cst_5 : f32 to vector<8x128xf32>
    %16 = arith.addf %15, %8 : vector<8x128xf32>
    %cst_6 = arith.constant 1.000000e+00 : f32
    %17 = vector.broadcast %cst_6 : f32 to vector<8x128xf32>
    %18 = arith.divf %17, %16 : vector<8x128xf32>
    %cst_7 = arith.constant 0.000000e+00 : f32
    %19 = vector.broadcast %cst_7 : f32 to vector<8x128xf32>
    %20 = arith.cmpf oge, %3, %19 : vector<8x128xf32>
    %21 = arith.mulf %8, %18 : vector<8x128xf32>
    %22 = arith.select %20, %18, %21 : vector<8x128xi1>, vector<8x128xf32>
    %23 = arith.subf %22, %4 : vector<8x128xf32>
    %cst_8 = arith.constant 1.000000e+00 : f32
    %24 = vector.broadcast %cst_8 : f32 to vector<8x128xf32>
    %25 = arith.subf %23, %24 : vector<8x128xf32>
    %cst_9 = arith.constant 5.010000e-02 : f32
    %26 = vector.broadcast %cst_9 : f32 to vector<8x128xf32>
    %27 = arith.divf %25, %26 : vector<8x128xf32>
    %28 = math.exp %27 : vector<8x128xf32>
    %cst_10 = arith.constant 1.000000e+00 : f32
    %29 = vector.broadcast %cst_10 : f32 to vector<8x128xf32>
    %30 = arith.subf %29, %28 : vector<8x128xf32>
    %c0_11 = arith.constant 0 : index
    %c0_12 = arith.constant 0 : index
    %31 = vector.load %arg5[%c0_11, %c0_12] : memref<8x128xf32, #tpu.memory_space<vmem>>, vector<8x128xf32>
    %32 = arith.mulf %14, %30 : vector<8x128xf32>
    %33 = arith.addf %31, %32 : vector<8x128xf32>
    %c0_13 = arith.constant 0 : index
    %c0_14 = arith.constant 0 : index
    %34 = vector.load %arg5[%c0_13, %c0_14] : memref<8x128xf32, #tpu.memory_space<vmem>>, vector<8x128xf32>
    tpu.vector_store %arg5[%c0_13, %c0_14], %33 {strides = array<i32>} : memref<8x128xf32, #tpu.memory_space<vmem>>, vector<8x128xf32>,
    %c0_i32_15 = arith.constant 0 : i32
    %35 = arith.cmpi eq, %arg1, %c0_i32_15 : i32
    %36 = arith.extui %35 : i1 to i32
    %c0_i32_16 = arith.constant 0 : i32
    %37 = arith.cmpi ne, %36, %c0_i32_16 : i32
    scf.if %37 {
      %c0_17 = arith.constant 0 : index
      %c0_18 = arith.constant 0 : index
      %38 = vector.load %arg5[%c0_17, %c0_18] : memref<8x128xf32, #tpu.memory_space<vmem>>, vector<8x128xf32>
      %cst_19 = arith.constant dense<0.000000e+00> : vector<128xf32>
      %39 = vector.multi_reduction <add>, %38, %cst_19 [0] : vector<8x128xf32> to vector<128xf32>
      %40 = vector.shape_cast %39 : vector<128xf32> to vector<1x128xf32>
      %c0_20 = arith.constant 0 : index
      %c0_21 = arith.constant 0 : index
      %c0_22 = arith.constant 0 : index
      %41 = vector.load %arg4[%c0_20, %c0_21, %c0_22] : memref<1x1x128xf32, #tpu.memory_space<vmem>>, vector<1x1x128xf32>
      %42 = vector.shape_cast %41 : vector<1x1x128xf32> to vector<1x128xf32>
      %43 = vector.shape_cast %40 : vector<1x128xf32> to vector<1x1x128xf32>
      tpu.vector_store %arg4[%c0_20, %c0_21, %c0_22], %43 {strides = array<i32>} : memref<1x1x128xf32, #tpu.memory_space<vmem>>, vector<1x1x128xf32>,
    } else {
    }
    return
  }
  func.func @transform_0(%arg0: i32, %arg1: i32) -> (i32, i32) {
    %c1_i32 = arith.constant 1 : i32
    %0 = arith.muli %arg0, %c1_i32 : i32
    %1 = arith.addi %0, %arg1 : i32
    %c0_i32 = arith.constant 0 : i32
    %c0_i32_0 = arith.constant 0 : i32
    return %1, %c0_i32 : i32, i32
  }
  func.func @transform_1(%arg0: i32, %arg1: i32) -> (i32, i32) {
    %c1_i32 = arith.constant 1 : i32
    %0 = arith.muli %arg0, %c1_i32 : i32
    %1 = arith.addi %0, %arg1 : i32
    %c0_i32 = arith.constant 0 : i32
    %c0_i32_0 = arith.constant 0 : i32
    return %1, %c0_i32 : i32, i32
  }
  func.func @transform_2(%arg0: i32, %arg1: i32) -> (i32, i32, i32) {
    %c0_i32 = arith.constant 0 : i32
    %c0_i32_0 = arith.constant 0 : i32
    %c0_i32_1 = arith.constant 0 : i32
    return %arg0, %c0_i32, %c0_i32_0 : i32, i32, i32
  }
}

</mosaic_0001>

<llo_original>
// kernel: tpu_custom_call.1
$region0: #{tpu_custom_call.1}
  #allocation0 [shape = 'u32[]', space=smem, size = 0x4, offset = 0x4, fixed_abs, tag = 'smem constant byte address 0x4 - core index']
  #allocation1 [shape = 'u32[72,128]{1,0:T(1,128)}', space=vmem, size = 0x9000, scoped, tag = 'internal scratch']
  #allocation2 [shape = 'f32[8,128]{1,0:T(8,128)}', space=vmem, size = 0x1000, scoped, tag = 'scratch operand']
  %s0 = inlined_call_operand.hbm [shape: f32[16,128], index: 0, kind: input, shape index: {}]
  %s1 = inlined_call_operand.hbm [shape: f32[16,128], index: 1, kind: input, shape index: {}]
  %s2 = inlined_call_operand.hbm [shape: f32[2,1,128], index: 2, kind: output, shape index: {}]
  %s3 = sld [smem:[#allocation0]]
  $region57: #{tpu_custom_call.1} parent=0
    _
  %s5 = ssub.s32 1, %s3
  %s6 = scalar_select 0, %s5, %s3
  $region1: #{tpu_custom_call.1} parent=0
    #allocation3 [shape = 'u8[8192]{0}', space=vmem, size = 0x2000, scoped, tag = 'input window, operand 0']
    #allocation4 [shape = 's32[2]{0}', space=sflag, size = 0x8, scoped, tag = 'scoped memory for tpu_custom_call.1']
    #allocation5 [shape = 's32[2]{0}', space=sflag, size = 0x8, scoped, tag = 'scoped memory for tpu_custom_call.1']
    #allocation6 [shape = 'u8[8192]{0}', space=vmem, size = 0x2000, scoped, tag = 'input window, operand 1']
    #allocation7 [shape = 's32[2]{0}', space=sflag, size = 0x8, scoped, tag = 'scoped memory for tpu_custom_call.1']
    #allocation8 [shape = 'u8[1024]{0}', space=vmem, size = 0x400, scoped, tag = 'output window, operand 0']
    %7 = vsyncpa [#allocation4], 0
    %s8 = scalar_lea.sflag [#allocation4], 1
    %9 = vsyncpa %s8, 0
    %10 = vsyncpa [#allocation7], 0
    %s11 = scalar_lea.sflag [#allocation7], 1
    %12 = vsyncpa %s11, 0
    %13 = vsyncpa [#allocation5], 0
    %s14 = scalar_lea.sflag [#allocation5], 1
    %15 = vsyncpa %s14, 0
    loop: start=0, step=1, limit=4
    $region2: #{tpu_custom_call.1} parent=1 // loop_pre_header
      _
    $region3: #{tpu_custom_call.1} parent=1 // loop_header
      %s17 = sphi 0, %s21
      %p18 = scmp.ge.s32.totalorder %s17, 4
      %s24 = sphi 0, %s36
      %s25 = sphi 0, %s32
      %s26 = sphi 0, %s24
      %s27 = sphi 0, %s25
      %s28 = sphi 0, %s26
      %s29 = sphi 0, %s27
      %s41 = sphi 0, %s43
      %s44 = sphi 0, %s41
      %s45 = sphi 0, %s44
      %s61 = sphi 0, %s45
      %s69 = sphi 0, %s71
      %s72 = sphi 0, %s69
      %s73 = sphi 0, %s72
      %s89 = sphi 0, %s73
      %s95 = sphi 0, %s97
      %s98 = sphi 0, %s95
      %s99 = sphi 0, %s98
      %s115 = sphi 0, %s99
    $region4: #{tpu_custom_call.1} parent=1 // loop_header_branch
      %20 = sbr.rel (%p18) target = $region8
    $region5: #{tpu_custom_call.1} parent=1 // loop_body
      %s22 = ssub.s32 %s17, 1
      %s23 = ssub.s32 %s17, 2
      %s30 = sadd.s32 1, %s25
      %p31 = scmp.ge.s32.totalorder %s30, 1
      %s32 = scalar_select %p31, 0, %s30
      %s33 = sadd.s32 1, %s24
      %s34 = scalar_select %p31, %s33, %s24
      %p35 = scmp.ge.s32.totalorder %s34, 2
      %s36 = scalar_select %p35, 0, %s34
      %s37 = sadd.s32 %s24, %s25
      %s38 = sadd.s32 %s36, %s32
      %s39 = ssub.s32 %s37, %s38
      %p40 = scmp.eq.s32.totalorder %s39, 0
      %s42 = sadd.s32 %s41, 1
      %s43 = scalar_select %p40, %s41, %s42
      %p46 = pneg %p40
      %p47 = scmp.eq.s32.totalorder %s17, 1
      %p48 = por %p46, %p47
      %p49 = scmp.ne.s32.totalorder %s41, %s44
      %p50 = scmp.eq.s32.totalorder %s17, 0
      %p51 = por %p49, %p50
      %p52 = scmp.ne.s32.totalorder %s41, %s44
      %p53 = scmp.eq.s32.totalorder %s22, 1
      %p54 = por %p52, %p53
      %p55 = scmp.ne.s32.totalorder %s44, %s45
      %p56 = scmp.eq.s32.totalorder %s22, 0
      %p57 = por %p55, %p56
      %p58 = scmp.ne.s32.totalorder %s44, %s45
      %p59 = scmp.eq.s32.totalorder %s23, 1
      %p60 = por %p58, %p59
      %p62 = scmp.ne.s32.totalorder %s45, %s61
      %p63 = scmp.eq.s32.totalorder %s23, 0
      %p64 = por %p62, %p63
      %s65 = sadd.s32 %s24, %s25
      %s66 = sadd.s32 %s36, %s32
      %s67 = ssub.s32 %s65, %s66
      %p68 = scmp.eq.s32.totalorder %s67, 0
      %s70 = sadd.s32 %s69, 1
      %s71 = scalar_select %p68, %s69, %s70
      %p74 = pneg %p68
      %p75 = scmp.eq.s32.totalorder %s17, 1
      %p76 = por %p74, %p75
      %p77 = scmp.ne.s32.totalorder %s69, %s72
      %p78 = scmp.eq.s32.totalorder %s17, 0
      %p79 = por %p77, %p78
      %p80 = scmp.ne.s32.totalorder %s69, %s72
      %p81 = scmp.eq.s32.totalorder %s22, 1
      %p82 = por %p80, %p81
      %p83 = scmp.ne.s32.totalorder %s72, %s73
      %p84 = scmp.eq.s32.totalorder %s22, 0
      %p85 = por %p83, %p84
      %p86 = scmp.ne.s32.totalorder %s72, %s73
      %p87 = scmp.eq.s32.totalorder %s23, 1
      %p88 = por %p86, %p87
      %p90 = scmp.ne.s32.totalorder %s73, %s89
      %p91 = scmp.eq.s32.totalorder %s23, 0
      %p92 = por %p90, %p91
      %s93 = ssub.s32 %s24, %s36
      %p94 = scmp.eq.s32.totalorder %s93, 0
      %s96 = sadd.s32 %s95, 1
      %s97 = scalar_select %p94, %s95, %s96
      %p100 = pneg %p94
      %p101 = scmp.eq.s32.totalorder %s17, 1
      %p102 = por %p100, %p101
      %p103 = scmp.ne.s32.totalorder %s95, %s98
      %p104 = scmp.eq.s32.totalorder %s17, 0
      %p105 = por %p103, %p104
      %p106 = scmp.ne.s32.totalorder %s95, %s98
      %p107 = scmp.eq.s32.totalorder %s22, 1
      %p108 = por %p106, %p107
      %p109 = scmp.ne.s32.totalorder %s98, %s99
      %p110 = scmp.eq.s32.totalorder %s22, 0
      %p111 = por %p109, %p110
      %p112 = scmp.ne.s32.totalorder %s98, %s99
      %p113 = scmp.eq.s32.totalorder %s23, 1
      %p114 = por %p112, %p113
      %p116 = scmp.ne.s32.totalorder %s99, %s115
      %p117 = scmp.eq.s32.totalorder %s23, 0
      %p118 = por %p116, %p117
      %p119 = scmp.le.s32.totalorder 1, %s17
      %p120 = scmp.lt.s32.totalorder %s17, 3
      %p121 = pnand %p119, %p120
      %p122 = pneg %p121
      // Predicated region
      $region9: #{tpu_custom_call.1} parent=5 // pred_check
        _
      $region10: #{tpu_custom_call.1} parent=5 // pred_check_branch
        %124 = sbr.rel (%p121) target = $region12
      $region11: #{tpu_custom_call.1} parent=5 // pred_region
        %s125 = ssub.s32 %s17, 1
      $region12: #{tpu_custom_call.1} parent=5 // pred_fallthru
        _
      %p126 = scmp.lt.s32.totalorder %s17, 2
      // Predicated region
      $region13: #{tpu_custom_call.1} parent=5 // pred_check
        %p127 = pneg %p126
      $region14: #{tpu_custom_call.1} parent=5 // pred_check_branch
        %129 = sbr.rel (%p127) target = $region16
      $region15: #{tpu_custom_call.1} parent=5 // pred_region
        // Predicated region
        $region17: #{tpu_custom_call.1} parent=15 // pred_check
          %p130 = pneg %p51
        $region18: #{tpu_custom_call.1} parent=15 // pred_check_branch
          %132 = sbr.rel (%p130) target = $region20
        $region19: #{tpu_custom_call.1} parent=15 // pred_region
          %s133 = sand.u32 %s41, 1
          %s134 = scalar_lea.sflag [#allocation4], %s133
          %s135 = sand.u32 %s41, 1
          %s136 = smul.addr %s135, 8
          %s137 = scalar_lea.vmem [#allocation3], %s136
          %s138 = sadd.s32 %s24, %s25
          %140 = vsyncadd %s134, 0
          %s141 = smul.addr %s138, 8
          %s142 = scalar_lea.hbm %s0, %s141
          %s144 = sshll.u32 %s142, 4
          %s145 = int_to_ptr.hbm [resolvable:$true] %s144
          %s146 = sshll.u32 %s137, 4
          %s147 = int_to_ptr.vmem [resolvable:$true] %s146
          %149 = dma.hbm_to_vmem [thread:$0]  %s145, 128, %s147, %s134
        $region20: #{tpu_custom_call.1} parent=15 // pred_fallthru
          _
        // Predicated region
        $region21: #{tpu_custom_call.1} parent=15 // pred_check
          %p150 = pneg %p79
        $region22: #{tpu_custom_call.1} parent=15 // pred_check_branch
          %152 = sbr.rel (%p150) target = $region24
        $region23: #{tpu_custom_call.1} parent=15 // pred_region
          %s153 = sand.u32 %s69, 1
          %s154 = scalar_lea.sflag [#allocation7], %s153
          %s155 = sand.u32 %s69, 1
          %s156 = smul.addr %s155, 8
          %s157 = scalar_lea.vmem [#allocation6], %s156
          %s158 = sadd.s32 %s24, %s25
          %160 = vsyncadd %s154, 0
          %s161 = smul.addr %s158, 8
          %s162 = scalar_lea.hbm %s1, %s161
          %s164 = sshll.u32 %s162, 4
          %s165 = int_to_ptr.hbm [resolvable:$true] %s164
          %s166 = sshll.u32 %s157, 4
          %s167 = int_to_ptr.vmem [resolvable:$true] %s166
          %169 = dma.hbm_to_vmem [thread:$0]  %s165, 128, %s167, %s154
        $region24: #{tpu_custom_call.1} parent=15 // pred_fallthru
          _
      $region16: #{tpu_custom_call.1} parent=5 // pred_fallthru
        _
      %p170 = scmp.le.s32.totalorder 1, %s17
      %p171 = scmp.lt.s32.totalorder %s17, 3
      %p172 = pnand %p170, %p171
      %p173 = pneg %p172
      // Predicated region
      $region25: #{tpu_custom_call.1} parent=5 // pred_check
        _
      $region26: #{tpu_custom_call.1} parent=5 // pred_check_branch
        %175 = sbr.rel (%p172) target = $region28
      $region27: #{tpu_custom_call.1} parent=5 // pred_region
        %s176 = ssub.s32 %s17, 1
        %s177 = sand.u32 %s44, 1
        %s178 = scalar_lea.sflag [#allocation4], %s177
        %s179 = sand.u32 %s44, 1
        %s180 = smul.addr %s179, 8
        %s181 = scalar_lea.vmem [#allocation3], %s180
        // Predicated region
        $region29: #{tpu_custom_call.1} parent=27 // pred_check
          %p182 = pneg %p57
        $region30: #{tpu_custom_call.1} parent=27 // pred_check_branch
          %184 = sbr.rel (%p182) target = $region32
        $region31: #{tpu_custom_call.1} parent=27 // pred_region
          %186 = dma.done %s178, 128
        $region32: #{tpu_custom_call.1} parent=27 // pred_fallthru
          _
        %s187 = sand.u32 %s72, 1
        %s188 = scalar_lea.sflag [#allocation7], %s187
        %s189 = sand.u32 %s72, 1
        %s190 = smul.addr %s189, 8
        %s191 = scalar_lea.vmem [#allocation6], %s190
        // Predicated region
        $region33: #{tpu_custom_call.1} parent=27 // pred_check
          %p192 = pneg %p85
        $region34: #{tpu_custom_call.1} parent=27 // pred_check_branch
          %194 = sbr.rel (%p192) target = $region36
        $region35: #{tpu_custom_call.1} parent=27 // pred_region
          %196 = dma.done %s188, 128
        $region36: #{tpu_custom_call.1} parent=27 // pred_fallthru
          _
        %s197 = sand.u32 %s44, 1
        %s198 = scalar_lea.sflag [#allocation4], %s197
        %s199 = sand.u32 %s44, 1
        %s200 = smul.addr %s199, 8
        %s201 = scalar_lea.vmem [#allocation3], %s200
        %p202 = pneg %p57
        %p203 = pneg %p54
        %s204 = sand.u32 %s72, 1
        %s205 = scalar_lea.sflag [#allocation7], %s204
        %s206 = sand.u32 %s72, 1
        %s207 = smul.addr %s206, 8
        %s208 = scalar_lea.vmem [#allocation6], %s207
        %p209 = pneg %p85
        %p210 = pneg %p82
        %p211 = pneg %p111
        %p212 = pneg %p108
        %s213 = sand.u32 %s98, 1
        %s214 = scalar_lea.sflag [#allocation5], %s213
        %s215 = sand.u32 %s98, 1
        %s216 = scalar_lea.vmem [#allocation8], %s215
        %s217 = sadd.s32 %s26, %s27
        %s218 = sadd.s32 %s26, %s27
        %p219 = scmp.eq.s32.totalorder %s27, 0
        // Predicated region
        $region37: #{tpu_custom_call.1} parent=27 // pred_check
          %p220 = pneg %p219
        $region38: #{tpu_custom_call.1} parent=27 // pred_check_branch
          %222 = sbr.rel (%p220) target = $region40
        $region39: #{tpu_custom_call.1} parent=27 // pred_region
          %223 = vst [vmem:[#allocation2] sm:$0xff] 0.0
        $region40: #{tpu_custom_call.1} parent=27 // pred_fallthru
          _
        %v224 = vld [vmem:[%s181] sm:$0xff]
        %v225 = vld [vmem:[%s191] sm:$0xff]
        %v226 = vand.u32 2147483647, %v224
        %v227 = vsub.f32 0.0, %v226
        %v228 = vmul.f32 %v227, 1.442695
        %v229 = vpow.pop %v228
        %v230 = vmax.f32 %v224, 0.0
        %v231 = vmul.f32 %v224, %v225
        %v232 = vsub.f32 %v230, %v231
        %v233 = vadd.f32 %v229, 1.0
        %v234 = vlog2.pop %v233
        %v235 = vmul.f32 %v234, 0.6931472
        %v236 = vmul.f32 -0.5, %v229
        %v237 = vadd.f32 %v236, 1.0
        %v238 = vmul.f32 %v237, %v229
        %v239 = vand.u32 2147483647, %v229
        %vm240 = vcmp.lt.f32.partialorder %v239, 0.0004427343
        %v241 = vsel %vm240, %v238, %v235
        %v242 = vadd.f32 %v232, %v241
        %v243 = vadd.f32 %v229, 1.0
        %v244 = vrcp.pop %v243
        %v245 = vmul.f32 %v243, %v244
        %v246 = vsub.f32 1.0, %v245
        %v247 = vmul.f32 %v244, %v246
        %v248 = vadd.f32 %v244, %v247
        %vm249 = vweird.f32 %v243
        %vm250 = vweird.f32 %v244
        %vm251 = vmor %vm249, %vm250
        %v252 = vsel %vm251, %v244, %v248
        %v253 = vand.u32 2147483647, %v243
        %vm254 = vcmp.eq.f32.partialorder %v253, 8.507059e+37
        %v255 = vand.u32 %v243, 2147483648
        %v256 = vor.u32 1.1754944e-38, %v255
        %v257 = vsel %vm254, %v256, %v252
        %v258 = vmul.f32 1.0, %v257
        %vm259 = vcmp.ge.f32.partialorder %v224, 0.0
        %v260 = vmul.f32 %v229, %v258
        %v261 = vsel %vm259, %v258, %v260
        %v262 = vsub.f32 %v261, %v225
        %v263 = vsub.f32 %v262, 1.0
        %v264 = vrcp.pop 0.0501
        %v265 = vmul.f32 0.0501, %v264
        %v266 = vsub.f32 1.0, %v265
        %v267 = vmul.f32 %v264, %v266
        %v268 = vadd.f32 %v264, %v267
        %vm269 = vweird.f32 %v264
        %v270 = vsel %vm269, %v264, %v268
        %v271 = vmul.f32 %v263, %v270
        %v272 = vmul.f32 %v271, 1.442695
        %v273 = vpow.pop %v272
        %v274 = vsub.f32 1.0, %v273
        %v275 = vld [vmem:[#allocation2] sm:$0xff]
        %v276 = vmul.f32 %v242, %v274
        %v277 = vadd.f32 %v275, %v276
        %278 = vst [vmem:[#allocation2] sm:$0xff] %v277
        // Predicated region
        $region41: #{tpu_custom_call.1} parent=27 // pred_check
          %p279 = pneg %p219
        $region42: #{tpu_custom_call.1} parent=27 // pred_check_branch
          %281 = sbr.rel (%p279) target = $region44
        $region43: #{tpu_custom_call.1} parent=27 // pred_region
          %v282 = vld [vmem:[#allocation2] sm:$0xff]
          %v283 = vrot.slane %v282, 4
          %v284 = vadd.f32 %v282, %v283
          %v285 = vrot.slane %v284, 2
          %v286 = vadd.f32 %v284, %v285
          %v287 = vrot.slane %v286, 1
          %v288 = vadd.f32 %v286, %v287
          %289 = vst [vmem:[%s216] sm:$0x1] %v288
        $region44: #{tpu_custom_call.1} parent=27 // pred_fallthru
          _
        %s290 = sand.u32 %s98, 1
        %s291 = scalar_lea.sflag [#allocation5], %s290
        %s292 = sand.u32 %s98, 1
        %s293 = scalar_lea.vmem [#allocation8], %s292
        // Predicated region
        $region45: #{tpu_custom_call.1} parent=27 // pred_check
          %p294 = pneg %p108
        $region46: #{tpu_custom_call.1} parent=27 // pred_check_branch
          %296 = sbr.rel (%p294) target = $region48
        $region47: #{tpu_custom_call.1} parent=27 // pred_region
          %298 = vsyncadd %s291, 0
          %s299 = scalar_lea.hbm %s2, %s26
          %s301 = sshll.u32 %s293, 4
          %s302 = int_to_ptr.vmem [resolvable:$true] %s301
          %s303 = sshll.u32 %s299, 4
          %s304 = int_to_ptr.hbm [resolvable:$true] %s303
          %306 = dma.vmem_to_hbm [thread:$0]  %s302, 16, %s304, %s291
        $region48: #{tpu_custom_call.1} parent=27 // pred_fallthru
          _
      $region28: #{tpu_custom_call.1} parent=5 // pred_fallthru
        _
      %p307 = scmp.le.s32.totalorder 2, %s17
      // Predicated region
      $region49: #{tpu_custom_call.1} parent=5 // pred_check
        %p308 = pneg %p307
      $region50: #{tpu_custom_call.1} parent=5 // pred_check_branch
        %310 = sbr.rel (%p308) target = $region52
      $region51: #{tpu_custom_call.1} parent=5 // pred_region
        %s311 = ssub.s32 %s17, 2
        // Predicated region
        $region53: #{tpu_custom_call.1} parent=51 // pred_check
          %p312 = pneg %p114
        $region54: #{tpu_custom_call.1} parent=51 // pred_check_branch
          %314 = sbr.rel (%p312) target = $region56
        $region55: #{tpu_custom_call.1} parent=51 // pred_region
          %s315 = sand.u32 %s99, 1
          %s316 = scalar_lea.sflag [#allocation5], %s315
          %s317 = sand.u32 %s99, 1
          %s318 = scalar_lea.vmem [#allocation8], %s317
          %320 = dma.done %s316, 16
        $region56: #{tpu_custom_call.1} parent=51 // pred_fallthru
          _
      $region52: #{tpu_custom_call.1} parent=5 // pred_fallthru
        _
    $region6: #{tpu_custom_call.1} parent=1 // loop_footer
      %s21 = sadd.s32 1, %s17
    $region7: #{tpu_custom_call.1} parent=1 // loop_footer_branch
      %16 = sbr.rel target = $region3
    $region8: #{tpu_custom_call.1} parent=1 // loop_exit
      _
    %321 = vsyncpa [#allocation4], 1
    %s322 = scalar_lea.sflag [#allocation4], 1
    %323 = vsyncpa %s322, 1
    %324 = vsyncpa [#allocation7], 1
    %s325 = scalar_lea.sflag [#allocation7], 1
    %326 = vsyncpa %s325, 1
    %327 = vsyncpa [#allocation5], 1
    %s328 = scalar_lea.sflag [#allocation5], 1
    %329 = vsyncpa %s328, 1

</llo_original>
